<compile_context>
chip_gen: v7x
topology: tpu7x:2x2x1
jax: 0.10.0
libtpu: 0.0.40
codegen_flags: <defaults>
</compile_context>

<pallas_src>
import functools
import math

import jax
import jax.numpy as jnp
from jax.experimental import pallas as pl
from jax.experimental.pallas import tpu as pltpu


def _rmsnorm_kernel(x_ref, w_ref, o_ref, *, eps):
    # x_ref: (tm, h) in input dtype; w_ref: (1, h); o_ref: (tm, h)
    x = x_ref[...].astype(jnp.float32)
    w = w_ref[...].astype(jnp.float32)                      # (1, h) broadcast row
    ms = jnp.mean(x * x, axis=-1, keepdims=True)            # (tm, 1)
    normed = x * jax.lax.rsqrt(ms + eps)                    # EUP rsqrt
    out = normed * (1.0 + w)
    o_ref[...] = out.astype(o_ref.dtype)


def gemma2_rmsnorm(x, weight, *, eps=1e-6, tm=256):
    """x: (..., hidden). weight: (hidden,). Returns same shape/dtype as x."""
    orig_shape = x.shape
    h = orig_shape[-1]
    m = math.prod(orig_shape[:-1]) if len(orig_shape) > 1 else 1
    x2d = x.reshape(m, h)

    # Row tile: multiple of 8 (sublane), no bigger than the (padded) row count.
    m_align = ((m + 7) // 8) * 8
    tm_eff = max(8, min((tm // 8) * 8, m_align))
    m_pad = pl.cdiv(m, tm_eff) * tm_eff
    if m_pad != m:
        # Zero padding is safe: rsqrt(0 + eps) is finite; padded rows discarded.
        x2d = jnp.pad(x2d, ((0, m_pad - m), (0, 0)))

    w2d = weight.reshape(1, h)

    out2d = pl.pallas_call(
        functools.partial(_rmsnorm_kernel, eps=eps),
        out_shape=jax.ShapeDtypeStruct((m_pad, h), x.dtype),
        grid_spec=pltpu.PrefetchScalarGridSpec(
            num_scalar_prefetch=0,
            grid=(m_pad // tm_eff,),
            in_specs=[
                pl.BlockSpec((tm_eff, h), lambda i: (i, 0)),  # x row-tile
                pl.BlockSpec((1, h), lambda i: (0, 0)),       # weight (resident)
            ],
            out_specs=pl.BlockSpec((tm_eff, h), lambda i: (i, 0)),
        ),
        compiler_params=pltpu.CompilerParams(
            dimension_semantics=("parallel",),   # shard row tiles across TCs (v7x)
            vmem_limit_bytes=64 << 20,
        ),
    )(x2d, w2d)

    if m_pad != m:
        out2d = out2d[:m]
    return out2d.reshape(orig_shape)


def _ref_rmsnorm(x, weight, eps=1e-6):
    xf = x.astype(jnp.float32)
    out = xf * jax.lax.rsqrt(jnp.mean(xf * xf, axis=-1, keepdims=True) + eps)
    out = out * (1.0 + weight.astype(jnp.float32))
    return out.astype(x.dtype)


if __name__ == "__main__":
    # Small synthetic config: batch=2, seq=8, hidden=32
    batch, seq, hidden = 2, 8, 32

    key = jax.random.PRNGKey(0)
    kx, kw = jax.random.split(key, 2)

    x = jax.random.normal(kx, (batch, seq, hidden), dtype=jnp.float32)
    # PyTorch inits weight to zeros; use random values so the (1 + w) scale
    # path is actually exercised.
    weight = jax.random.normal(kw, (hidden,), dtype=jnp.float32) * 0.1

    out = gemma2_rmsnorm(x, weight, eps=1e-6)
    jax.block_until_ready(out)

    ref = _ref_rmsnorm(x, weight, eps=1e-6)
    assert out.shape == x.shape and out.dtype == x.dtype
    assert jnp.allclose(out, ref, atol=1e-5, rtol=1e-5), "mismatch vs reference"

    # Also exercise a non-multiple row count + bf16 round-trip path.
    xb = jax.random.normal(kx, (3, 7, hidden), dtype=jnp.bfloat16)
    outb = gemma2_rmsnorm(xb, weight.astype(jnp.bfloat16), eps=1e-6)
    jax.block_until_ready(outb)
    refb = _ref_rmsnorm(xb, weight.astype(jnp.bfloat16), eps=1e-6)
    assert jnp.allclose(outb.astype(jnp.float32), refb.astype(jnp.float32),
                        atol=2e-2, rtol=2e-2), "bf16 mismatch vs reference"

    print("KERNEL_OK")
</pallas_src>

<mosaic_0001>
module attributes {stable_mosaic.version = 11 : i64} {
  func.func @_rmsnorm_kernel(%arg0: i32, %arg1: memref<16x32xf32, #tpu.memory_space<vmem>>, %arg2: memref<1x32xf32, #tpu.memory_space<vmem>>, %arg3: memref<16x32xf32, #tpu.memory_space<vmem>>) attributes {dimension_semantics = [#tpu.dimension_semantics<parallel>], iteration_bounds = array<i64: 1>, scalar_prefetch = 0 : i64, scratch_operands = 0 : i64, tpu.core_type = #tpu.core_type<tc>, window_params = [{transform_indices = @transform_0, window_bounds = array<i64: 16, 32>}, {pipeline_mode = #tpu.pipeline_mode<synchronous>, transform_indices = @transform_1, window_bounds = array<i64: 1, 32>}, {transform_indices = @transform_2, window_bounds = array<i64: 16, 32>}]} {
    %c0 = arith.constant 0 : index
    %c0_0 = arith.constant 0 : index
    %0 = vector.load %arg1[%c0, %c0_0] : memref<16x32xf32, #tpu.memory_space<vmem>>, vector<16x32xf32>
    %c0_1 = arith.constant 0 : index
    %c0_2 = arith.constant 0 : index
    %1 = vector.load %arg2[%c0_1, %c0_2] : memref<1x32xf32, #tpu.memory_space<vmem>>, vector<1x32xf32>
    %2 = arith.mulf %0, %0 : vector<16x32xf32>
    %cst = arith.constant dense<0.000000e+00> : vector<16xf32>
    %3 = vector.multi_reduction <add>, %2, %cst [1] : vector<16x32xf32> to vector<16xf32>
    %4 = vector.shape_cast %3 : vector<16xf32> to vector<16x1xf32>
    %cst_3 = arith.constant 3.200000e+01 : f32
    %5 = vector.broadcast %cst_3 : f32 to vector<16x1xf32>
    %6 = arith.divf %4, %5 : vector<16x1xf32>
    %cst_4 = arith.constant 9.99999997E-7 : f32
    %7 = vector.broadcast %cst_4 : f32 to vector<16x1xf32>
    %8 = arith.addf %6, %7 : vector<16x1xf32>
    %9 = math.rsqrt %8 : vector<16x1xf32>
    %10 = vector.broadcast %9 : vector<16x1xf32> to vector<16x32xf32>
    %11 = arith.mulf %0, %10 : vector<16x32xf32>
    %cst_5 = arith.constant 1.000000e+00 : f32
    %12 = vector.broadcast %cst_5 : f32 to vector<1x32xf32>
    %13 = arith.addf %12, %1 : vector<1x32xf32>
    %14 = vector.broadcast %13 : vector<1x32xf32> to vector<16x32xf32>
    %15 = arith.mulf %11, %14 : vector<16x32xf32>
    %c0_6 = arith.constant 0 : index
    %c0_7 = arith.constant 0 : index
    %16 = vector.load %arg3[%c0_6, %c0_7] : memref<16x32xf32, #tpu.memory_space<vmem>>, vector<16x32xf32>
    tpu.vector_store %arg3[%c0_6, %c0_7], %15 {strides = array<i32>} : memref<16x32xf32, #tpu.memory_space<vmem>>, vector<16x32xf32>,
    return
  }
  func.func @transform_0(%arg0: i32) -> (i32, i32) {
    %c0_i32 = arith.constant 0 : i32
    %c0_i32_0 = arith.constant 0 : i32
    return %arg0, %c0_i32 : i32, i32
  }
  func.func @transform_1(%arg0: i32) -> (i32, i32) {
    %c0_i32 = arith.constant 0 : i32
    %c0_i32_0 = arith.constant 0 : i32
    %c0_i32_1 = arith.constant 0 : i32
    return %c0_i32, %c0_i32_0 : i32, i32
  }
  func.func @transform_2(%arg0: i32) -> (i32, i32) {
    %c0_i32 = arith.constant 0 : i32
    %c0_i32_0 = arith.constant 0 : i32
    return %arg0, %c0_i32 : i32, i32
  }
}

</mosaic_0001>

<llo_original>
// kernel: tpu_custom_call.1
$region0: #{tpu_custom_call.1}
  #allocation0 [shape = 'u32[]', space=smem, size = 0x4, offset = 0x4, fixed_abs, tag = 'smem constant byte address 0x4 - core index']
  #allocation1 [shape = 'u32[144,128]{1,0:T(1,128)}', space=vmem, size = 0x12000, scoped, tag = 'internal scratch']
  %s0 = inlined_call_operand.hbm [shape: f32[16,32], index: 0, kind: input, shape index: {}]
  %s1 = inlined_call_operand.hbm [shape: f32[1,32], index: 1, kind: input, shape index: {}]
  %s2 = inlined_call_operand.hbm [shape: f32[16,32], index: 2, kind: output, shape index: {}]
  %s3 = sld [smem:[#allocation0]]
  $region26: #{tpu_custom_call.1} parent=0
    _
  %s5 = ssub.s32 1, %s3
  %s6 = scalar_select 0, %s5, %s3
  $region1: #{tpu_custom_call.1} parent=0
    #allocation2 [shape = 'u8[8192]{0}', space=vmem, size = 0x2000, scoped, tag = 'input window, operand 0, single buffered']
    #allocation3 [shape = 's32[1]{0}', space=sflag, size = 0x4, scoped, tag = 'scoped memory for tpu_custom_call.1']
    #allocation4 [shape = 's32[1]{0}', space=sflag, size = 0x4, scoped, tag = 'scoped memory for tpu_custom_call.1']
    #allocation5 [shape = 'u8[512]{0}', space=vmem, size = 0x400, scoped, tag = 'input window, operand 1, single buffered']
    #allocation6 [shape = 's32[1]{0}', space=sflag, size = 0x4, scoped, tag = 'scoped memory for tpu_custom_call.1']
    #allocation7 [shape = 'u8[8192]{0}', space=vmem, size = 0x2000, scoped, tag = 'output window, operand 0, single buffered']
    %7 = vsyncpa [#allocation3], 0
    %8 = vsyncpa [#allocation6], 0
    %9 = vsyncpa [#allocation4], 0
    // Predicated region
    $region2: #{tpu_custom_call.1} parent=1 // pred_check
      _
    $region3: #{tpu_custom_call.1} parent=1 // pred_check_branch
      %11 = sbr.rel (0) target = $region5
    $region4: #{tpu_custom_call.1} parent=1 // pred_region
      %s13 = ssub.s32 256, 256
      %14 = vsyncadd [#allocation3], %s13
      %s15 = sshll.u32 [#allocation2], 4
      %s16 = int_to_ptr.vmem [resolvable:$true] %s15
      %21 = dma.hbm_to_vmem [thread:$0]  %s0, 256, %s16, [#allocation3], 128, 128, 8
    $region5: #{tpu_custom_call.1} parent=1 // pred_fallthru
      _
    // Predicated region
    $region6: #{tpu_custom_call.1} parent=1 // pred_check
      _
    $region7: #{tpu_custom_call.1} parent=1 // pred_check_branch
      %23 = sbr.rel (0) target = $region9
    $region8: #{tpu_custom_call.1} parent=1 // pred_region
      %s25 = ssub.s32 16, 16
      %26 = vsyncadd [#allocation6], %s25
      %s28 = sshll.u32 [#allocation5], 4
      %s29 = int_to_ptr.vmem [resolvable:$true] %s28
      %31 = dma.hbm_to_vmem [thread:$0]  %s1, 16, %s29, [#allocation6]
    $region9: #{tpu_custom_call.1} parent=1 // pred_fallthru
      _
    // Predicated region
    $region10: #{tpu_custom_call.1} parent=1 // pred_check
      _
    $region11: #{tpu_custom_call.1} parent=1 // pred_check_branch
      %33 = sbr.rel (0) target = $region13
    $region12: #{tpu_custom_call.1} parent=1 // pred_region
      %34 = dma.done [#allocation3], 256
    $region13: #{tpu_custom_call.1} parent=1 // pred_fallthru
      _
    // Predicated region
    $region14: #{tpu_custom_call.1} parent=1 // pred_check
      _
    $region15: #{tpu_custom_call.1} parent=1 // pred_check_branch
      %36 = sbr.rel (0) target = $region17
    $region16: #{tpu_custom_call.1} parent=1 // pred_region
      %37 = dma.done [#allocation6], 16
    $region17: #{tpu_custom_call.1} parent=1 // pred_fallthru
      _
    %v38 = vld [vmem:[#allocation2] sm:$0xff]
    %v39 = vld [vmem:[#allocation2 + $0x8] sm:$0xff]
    %v40 = vld [vmem:[#allocation5] sm:$0x1]
    %v41 = vmul.f32 %v38, %v38
    %v42 = vmul.f32 %v39, %v39
    %vm43 = vcmask 261120
    %v44 = vsel %vm43, %v41, 0.0
    %45 = vadd.xlane.f32.xlu0 %v44
    %v46 = vpop.xlane.xlu0 %45
    %v47 = vsel %vm43, %v42, 0.0
    %48 = vadd.xlane.f32.xlu0 %v47
    %v49 = vpop.xlane.xlu0 %48
    %v50 = vrcp.pop 32.0
    %v51 = vmul.f32 %v46, %v50
    %v52 = vmul.f32 %v49, %v50
    %v53 = vadd.f32 %v51, 1e-06
    %v54 = vadd.f32 %v52, 1e-06
    %v55 = vrsqrt.pop %v53
    %v56 = vrsqrt.pop %v54
    %v57 = vmul.f32 %v38, %v55
    %v58 = vmul.f32 %v39, %v56
    %v59 = vadd.f32 %v40, 1.0
    %v61 = vlaneseq
    %v62 = vshrl.u32 %v61, 7
    %v63 = vsub.s32 0, %v62
    %v64 = vrot.slane %v59, %v63
    %v66 = vmul.f32 %v57, %v64
    %v67 = vmul.f32 %v58, %v64
    %68 = vst.msk [vmem:[#allocation7] sm:$0xff] %vm43, %v66
    %69 = vst.msk [vmem:[#allocation7 + $0x8] sm:$0xff] %vm43, %v67
    // Predicated region
    $region18: #{tpu_custom_call.1} parent=1 // pred_check
      _
    $region19: #{tpu_custom_call.1} parent=1 // pred_check_branch
      %71 = sbr.rel (0) target = $region21
    $region20: #{tpu_custom_call.1} parent=1 // pred_region
      %s73 = ssub.s32 256, 256
      %74 = vsyncadd [#allocation4], %s73
      %s75 = sshll.u32 [#allocation7], 4
      %s76 = int_to_ptr.vmem [resolvable:$true] %s75
      %81 = dma.vmem_to_hbm [thread:$0]  %s76, 256, %s2, [#allocation4], 128, 128, 8
    $region21: #{tpu_custom_call.1} parent=1 // pred_fallthru
      _
    // Predicated region
    $region22: #{tpu_custom_call.1} parent=1 // pred_check
      _
    $region23: #{tpu_custom_call.1} parent=1 // pred_check_branch
      %83 = sbr.rel (0) target = $region25
    $region24: #{tpu_custom_call.1} parent=1 // pred_region
      %84 = dma.done [#allocation4], 256
    $region25: #{tpu_custom_call.1} parent=1 // pred_fallthru
      _
    %85 = vsyncpa [#allocation3], 1
    %86 = vsyncpa [#allocation6], 1
    %87 = vsyncpa [#allocation4], 1

</llo_original>
